<compile_context>
chip_gen: v7x
topology: tpu7x:2x2x1
jax: 0.10.0
libtpu: 0.0.40
codegen_flags: <defaults>
</compile_context>

<pallas_src>
import functools

import jax
import jax.numpy as jnp
from jax import lax
from jax.experimental import pallas as pl
from jax.experimental.pallas import tpu as pltpu


def _self_attention_kernel(x_ref, w_qkv_ref, b_qkv_ref, o_ref, *, kv_tile):
    # Shapes inside the kernel:
    #   x_ref:     (Bb, S, Ep)
    #   w_qkv_ref: (Ep, 3*Ep)   pre-transposed, fused Q|K|V, 1/scale folded into Q
    #   b_qkv_ref: (1, 3*Ep)    f32
    #   o_ref:     (Bb, S, Ep)
    Bb, S, Ep = x_ref.shape
    mxu_dtype = w_qkv_ref.dtype          # f32, or bf16 when mxu_dtype is set

    # Fused QKV projection: one MXU pass with M = Bb*S rows, N = 3*Ep.
    x2d = x_ref[...].reshape(Bb * S, Ep)
    qkv = jnp.dot(x2d, w_qkv_ref[...], preferred_element_type=jnp.float32)
    qkv = qkv + b_qkv_ref[...]           # f32 bias added to the f32 accumulator

    # 1/scale is already folded into the Q columns of w_qkv / b_qkv.
    q = qkv[:, :Ep].reshape(Bb, S, Ep).astype(mxu_dtype)
    k = qkv[:, Ep:2 * Ep].reshape(Bb, S, Ep).astype(mxu_dtype)
    v = qkv[:, 2 * Ep:].reshape(Bb, S, Ep).astype(mxu_dtype)

    n_kv = S // kv_tile
    if n_kv <= 1:
        # Small S: materialize (Bb, S, S) once; cheaper than flash bookkeeping.
        scores = lax.dot_general(q, k, (((2,), (2,)), ((0,), (0,))),
                                 preferred_element_type=jnp.float32)
        m = jnp.max(scores, axis=-1, keepdims=True)
        e = jnp.exp(scores - m)
        denom = jnp.sum(e, axis=-1, keepdims=True)
        probs = (e * pl.reciprocal(denom, approx=True)).astype(mxu_dtype)
        out = lax.dot_general(probs, v, (((2,), (1,)), ((0,), (0,))),
                              preferred_element_type=jnp.float32)
    else:
        # Flash-style online softmax over kv tiles: score working set stays at
        # (Bb, S, kv_tile); the MXU on tile t+1 overlaps EUP exp / XLU reduce
        # of tile t instead of serializing projection -> softmax -> PV.
        m = jnp.full((Bb, S, 1), -jnp.inf, jnp.float32)
        l = jnp.zeros((Bb, S, 1), jnp.float32)
        acc = jnp.zeros((Bb, S, Ep), jnp.float32)
        for t in range(n_kv):            # static trip count -> unrolled
            lo = t * kv_tile
            k_t = k[:, lo:lo + kv_tile, :]
            v_t = v[:, lo:lo + kv_tile, :]
            s_t = lax.dot_general(q, k_t, (((2,), (2,)), ((0,), (0,))),
                                  preferred_element_type=jnp.float32)
            m_new = jnp.maximum(m, jnp.max(s_t, axis=-1, keepdims=True))
            alpha = jnp.exp(m - m_new)
            # TODO(synk): on v6e/v7x compute this exp in bf16 if profiling shows
            # the single EUP slot saturating at large S (not valid on v5e).
            p = jnp.exp(s_t - m_new)
            l = alpha * l + jnp.sum(p, axis=-1, keepdims=True)
            acc = alpha * acc + lax.dot_general(
                p.astype(mxu_dtype), v_t, (((2,), (1,)), ((0,), (0,))),
                preferred_element_type=jnp.float32)
            m = m_new
        out = acc * pl.reciprocal(l, approx=True)

    o_ref[...] = out.astype(o_ref.dtype)


def _vmem_capacity_bytes():
    try:
        return int(pltpu.get_tpu_info().vmem_capacity_bytes)
    except Exception:
        return 64 * 1024 * 1024          # conservative fallback (v7x per-TC VMEM)


def _pick_kv_tile(S, cap=512):
    """kv-tile length: S itself if small, else a lane/sublane-friendly divisor."""
    if S <= cap:
        return S
    for mult in (128, 8):
        for t in range(cap, mult - 1, -1):
            if S % t == 0 and t % mult == 0:
                return t
    return S


def _estimate_vmem_bytes(Bb, S, Ep, kv_tile, x_bytes, w_bytes):
    """Rough per-grid-step VMEM footprint (pipeline buffers + in-kernel temps)."""
    rows = Bb * S
    return (Ep * 3 * Ep * w_bytes        # fused weight, Buffered(1) -> one copy
            + 3 * Ep * 4                 # fused bias (f32)
            + 2 * rows * Ep * x_bytes    # x block, double-buffered
            + 2 * rows * Ep * 4          # out block (f32), double-buffered
            + rows * 3 * Ep * 4          # qkv f32 projection result
            + 3 * rows * Ep * x_bytes    # q/k/v copies in MXU dtype
            + 2 * rows * kv_tile * 4     # score tile + its exp
            + rows * Ep * 4              # flash accumulator
            + 2 * rows * 4)              # running max / sum


def _pick_block_b(B, S, Ep, kv_tile, x_bytes, w_bytes, budget):
    """Largest batch-block fitting the VMEM budget; keep grid >= 2 when B >= 2."""
    best = 1
    for d in range(1, B + 1):
        if B % d == 0 and _estimate_vmem_bytes(
                d, S, Ep, kv_tile, x_bytes, w_bytes) <= budget:
            best = d
    if B >= 2:
        # v7x has 2 TensorCores/chip: keep >= 2 'parallel' grid steps so neither
        # core idles; costs ~0.35us of extra step overhead on v5e/v6e.
        best = min(best, B // 2)
        while B % best:
            best -= 1
    return max(best, 1)


def self_attention(x, wq, bq, wk, bk, wv, bv, scale, *,
                   mxu_dtype=None, kv_tile_cap=512, keep_padded=False):
    """x: (B, S, E). w*: (E, E) torch-style (out, in). b*: (E,). scale: scalar.

    mxu_dtype: optional narrower dtype (jnp.bfloat16) for the MXU operands
      (x and the fused weight). Recommended on ALL TPU generations including
      v5e (bf16-native MXU; halves HBM/VMEM traffic); accumulation, bias add
      and the softmax path stay f32.
    kv_tile_cap: max kv-tile length for the in-kernel online softmax.
    keep_padded: return the lane-padded (B, S, Ep) output and skip the
      wrapper-side slice copy (useful when E << 128).
    """
    B, S, E = x.shape
    out_dtype = x.dtype

    # Lane-dense padding of the feature dim to a multiple of 128.
    Ep = ((E + 127) // 128) * 128
    pad_e = Ep - E

    inv_scale = 1.0 / jnp.asarray(scale, jnp.float32)

    def pad_w(w, col_scale=None):        # torch (out,in) -> kernel (in,out), padded
        wt = w.T.astype(jnp.float32)
        if col_scale is not None:
            wt = wt * col_scale
        return jnp.pad(wt, ((0, pad_e), (0, pad_e)))

    def pad_b(b, col_scale=None):
        b = b.astype(jnp.float32)
        if col_scale is not None:
            b = b * col_scale
        return jnp.pad(b, (0, pad_e))

    # Fuse Q|K|V weights/biases; fold 1/scale into the Q columns and bq so the
    # kernel never touches the scale.
    w_qkv = jnp.concatenate(
        [pad_w(wq, inv_scale), pad_w(wk), pad_w(wv)], axis=1)          # (Ep, 3Ep)
    b_qkv = jnp.concatenate(
        [pad_b(bq, inv_scale), pad_b(bk), pad_b(bv)]).reshape(1, 3 * Ep)
    x_p = jnp.pad(x, ((0, 0), (0, 0), (0, pad_e))) if pad_e else x

    if mxu_dtype is not None:
        x_p = x_p.astype(mxu_dtype)
        w_qkv = w_qkv.astype(mxu_dtype)
        # b_qkv deliberately stays f32: it is added to the f32 accumulator on
        # the VPU, never fed to the MXU.

    x_bytes = jnp.dtype(x_p.dtype).itemsize
    w_bytes = jnp.dtype(w_qkv.dtype).itemsize

    kv_tile = _pick_kv_tile(S, kv_tile_cap)

    # VMEM-budgeted block selection: target ~45% of physical VMEM so pipelining
    # survives on v7x (64 MiB) as well as on 128 MiB v5e/v6e parts.
    vmem_cap = _vmem_capacity_bytes()
    budget = int(vmem_cap * 0.45)
    Bb = _pick_block_b(B, S, Ep, kv_tile, x_bytes, w_bytes, budget)
    est = _estimate_vmem_bytes(Bb, S, Ep, kv_tile, x_bytes, w_bytes)
    vmem_limit = int(min(vmem_cap * 0.75, max(2 * est, 32 * 1024 * 1024)))

    grid = (B // Bb,)

    kernel = functools.partial(_self_attention_kernel, kv_tile=kv_tile)

    out = pl.pallas_call(
        kernel,
        out_shape=jax.ShapeDtypeStruct((B, S, Ep), out_dtype),
        grid_spec=pltpu.PrefetchScalarGridSpec(
            num_scalar_prefetch=0,
            grid=grid,
            in_specs=[
                pl.BlockSpec((Bb, S, Ep), lambda g: (g, 0, 0)),        # x block
                pl.BlockSpec((Ep, 3 * Ep), lambda g: (0, 0),
                             pipeline_mode=pl.Buffered(1)),            # fused W (const)
                pl.BlockSpec((1, 3 * Ep), lambda g: (0, 0),
                             pipeline_mode=pl.Buffered(1)),            # fused b (const)
            ],
            out_specs=pl.BlockSpec((Bb, S, Ep), lambda g: (g, 0, 0)),
        ),
        compiler_params=pltpu.CompilerParams(
            dimension_semantics=("parallel",),
            vmem_limit_bytes=vmem_limit),
    )(x_p, w_qkv, b_qkv)

    if keep_padded or pad_e == 0:
        return out
    return out[..., :E]


def _reference(x, wq, bq, wk, bk, wv, bv, scale):
    q = x @ wq.T + bq
    k = x @ wk.T + bk
    v = x @ wv.T + bv
    s = jnp.einsum("bqe,bke->bqk", q, k) / scale
    w = jax.nn.softmax(s, axis=-1)
    return jnp.einsum("bqk,bke->bqe", w, v)


if __name__ == "__main__":
    def make_params(key, E):
        kq, kbq, kk, kbk, kv, kbv = jax.random.split(key, 6)
        lim = 1.0 / jnp.sqrt(E)
        wq = jax.random.uniform(kq, (E, E), jnp.float32, -lim, lim)
        bq = jax.random.uniform(kbq, (E,), jnp.float32, -lim, lim)
        wk = jax.random.uniform(kk, (E, E), jnp.float32, -lim, lim)
        bk = jax.random.uniform(kbk, (E,), jnp.float32, -lim, lim)
        wv = jax.random.uniform(kv, (E, E), jnp.float32, -lim, lim)
        bv = jax.random.uniform(kbv, (E,), jnp.float32, -lim, lim)
        scale = jnp.sqrt(jnp.float32(E))          # nn.Parameter(sqrt(emb_dim))
        return wq, bq, wk, bk, wv, bv, scale

    # ---- Small-shape test (B=2, S=8, E=32): single-kv-tile path, f32 + bf16 MXU.
    B, S, E = 2, 8, 32
    kx, kp = jax.random.split(jax.random.PRNGKey(0))
    x = jax.random.normal(kx, (B, S, E), jnp.float32)
    params = make_params(kp, E)
    ref = _reference(x, *params)

    out = jax.block_until_ready(self_attention(x, *params))
    assert out.shape == (B, S, E)
    assert jnp.allclose(out, ref, atol=5e-3, rtol=5e-3), "f32 kernel mismatch vs reference"

    out_bf16 = jax.block_until_ready(
        self_attention(x, *params, mxu_dtype=jnp.bfloat16))
    assert jnp.allclose(out_bf16, ref, atol=5e-2, rtol=5e-2), "bf16 kernel mismatch vs reference"

    # ---- Larger-S test (B=2, S=256): exercises the flash-style kv-tiled online
    # softmax (kv_tile_cap=128 -> 2 kv tiles) and the grid>=2 batch split.
    B2, S2, E2 = 2, 256, 32
    kx2, kp2 = jax.random.split(jax.random.PRNGKey(1))
    x2 = jax.random.normal(kx2, (B2, S2, E2), jnp.float32)
    params2 = make_params(kp2, E2)
    ref2 = _reference(x2, *params2)
    out2 = jax.block_until_ready(self_attention(x2, *params2, kv_tile_cap=128))
    assert jnp.allclose(out2, ref2, atol=5e-3, rtol=5e-3), "kv-tiled kernel mismatch vs reference"

    print("KERNEL_OK")
</pallas_src>

<mosaic_0001>
module attributes {stable_mosaic.version = 11 : i64} {
  func.func @_self_attention_kernel(%arg0: i32, %arg1: memref<1x8x128xf32, #tpu.memory_space<vmem>>, %arg2: memref<128x384xf32, #tpu.memory_space<vmem>>, %arg3: memref<1x384xf32, #tpu.memory_space<vmem>>, %arg4: memref<1x8x128xf32, #tpu.memory_space<vmem>>) attributes {dimension_semantics = [#tpu.dimension_semantics<parallel>], iteration_bounds = array<i64: 2>, scalar_prefetch = 0 : i64, scratch_operands = 0 : i64, tpu.core_type = #tpu.core_type<tc>, window_params = [{transform_indices = @transform_0, window_bounds = array<i64: 1, 8, 128>}, {pipeline_mode = #tpu.pipeline_mode<synchronous>, transform_indices = @transform_1, window_bounds = array<i64: 128, 384>}, {pipeline_mode = #tpu.pipeline_mode<synchronous>, transform_indices = @transform_2, window_bounds = array<i64: 1, 384>}, {transform_indices = @transform_3, window_bounds = array<i64: 1, 8, 128>}]} {
    %c0 = arith.constant 0 : index
    %c0_0 = arith.constant 0 : index
    %c0_1 = arith.constant 0 : index
    %0 = vector.load %arg1[%c0, %c0_0, %c0_1] : memref<1x8x128xf32, #tpu.memory_space<vmem>>, vector<1x8x128xf32>
    %1 = vector.shape_cast %0 : vector<1x8x128xf32> to vector<8x128xf32>
    %c0_2 = arith.constant 0 : index
    %c0_3 = arith.constant 0 : index
    %2 = vector.load %arg2[%c0_2, %c0_3] : memref<128x384xf32, #tpu.memory_space<vmem>>, vector<128x384xf32>
    %cst = arith.constant dense<0.000000e+00> : vector<8x384xf32>
    %3 = tpu.matmul %1, %2, %cst {dimension_numbers = #tpu.dot_dimension_numbers<[1], [0], [0], [1], [0, 0, 1, 1], [], []>} : vector<8x128xf32>, vector<128x384xf32>, vector<8x384xf32> -> vector<8x384xf32>
    %c0_4 = arith.constant 0 : index
    %c0_5 = arith.constant 0 : index
    %4 = vector.load %arg3[%c0_4, %c0_5] : memref<1x384xf32, #tpu.memory_space<vmem>>, vector<1x384xf32>
    %5 = vector.broadcast %4 : vector<1x384xf32> to vector<8x384xf32>
    %6 = arith.addf %3, %5 : vector<8x384xf32>
    %7 = vector.extract_strided_slice %6 {offsets = [0, 0], sizes = [8, 128], strides = [1, 1]} : vector<8x384xf32> to vector<8x128xf32>
    %8 = vector.shape_cast %7 : vector<8x128xf32> to vector<1x8x128xf32>
    %9 = vector.extract_strided_slice %6 {offsets = [0, 128], sizes = [8, 128], strides = [1, 1]} : vector<8x384xf32> to vector<8x128xf32>
    %10 = vector.shape_cast %9 : vector<8x128xf32> to vector<1x8x128xf32>
    %11 = vector.extract_strided_slice %6 {offsets = [0, 256], sizes = [8, 128], strides = [1, 1]} : vector<8x384xf32> to vector<8x128xf32>
    %12 = vector.shape_cast %11 : vector<8x128xf32> to vector<1x8x128xf32>
    %cst_6 = arith.constant dense<0.000000e+00> : vector<1x8x8xf32>
    %13 = tpu.matmul %8, %10, %cst_6 {dimension_numbers = #tpu.dot_dimension_numbers<[2], [2], [1], [1], [0, 0, 0, 1, 1, 1], [0], [0]>} : vector<1x8x128xf32>, vector<1x8x128xf32>, vector<1x8x8xf32> -> vector<1x8x8xf32>
    %cst_7 = arith.constant dense<0xFF800000> : vector<1x8xf32>
    %14 = vector.multi_reduction <maximumf>, %13, %cst_7 [2] : vector<1x8x8xf32> to vector<1x8xf32>
    %15 = vector.shape_cast %14 : vector<1x8xf32> to vector<1x8x1xf32>
    %16 = vector.broadcast %15 : vector<1x8x1xf32> to vector<1x8x8xf32>
    %17 = arith.subf %13, %16 : vector<1x8x8xf32>
    %18 = math.exp %17 : vector<1x8x8xf32>
    %cst_8 = arith.constant dense<0.000000e+00> : vector<1x8xf32>
    %19 = vector.multi_reduction <add>, %18, %cst_8 [2] : vector<1x8x8xf32> to vector<1x8xf32>
    %20 = vector.shape_cast %19 : vector<1x8xf32> to vector<1x8x1xf32>
    %21 = tpu.reciprocal %20 {approx = true} : vector<1x8x1xf32> -> vector<1x8x1xf32>
    %22 = vector.broadcast %21 : vector<1x8x1xf32> to vector<1x8x8xf32>
    %23 = arith.mulf %18, %22 : vector<1x8x8xf32>
    %cst_9 = arith.constant dense<0.000000e+00> : vector<1x8x128xf32>
    %24 = tpu.matmul %23, %12, %cst_9 {dimension_numbers = #tpu.dot_dimension_numbers<[2], [1], [1], [2], [0, 0, 0, 1, 1, 2], [0], [0]>} : vector<1x8x8xf32>, vector<1x8x128xf32>, vector<1x8x128xf32> -> vector<1x8x128xf32>
    %c0_10 = arith.constant 0 : index
    %c0_11 = arith.constant 0 : index
    %c0_12 = arith.constant 0 : index
    %25 = vector.load %arg4[%c0_10, %c0_11, %c0_12] : memref<1x8x128xf32, #tpu.memory_space<vmem>>, vector<1x8x128xf32>
    tpu.vector_store %arg4[%c0_10, %c0_11, %c0_12], %24 {strides = array<i32>} : memref<1x8x128xf32, #tpu.memory_space<vmem>>, vector<1x8x128xf32>,
    return
  }
  func.func @transform_0(%arg0: i32) -> (i32, i32, i32) {
    %c0_i32 = arith.constant 0 : i32
    %c0_i32_0 = arith.constant 0 : i32
    %c0_i32_1 = arith.constant 0 : i32
    return %arg0, %c0_i32, %c0_i32_0 : i32, i32, i32
  }
  func.func @transform_1(%arg0: i32) -> (i32, i32) {
    %c0_i32 = arith.constant 0 : i32
    %c0_i32_0 = arith.constant 0 : i32
    %c0_i32_1 = arith.constant 0 : i32
    return %c0_i32, %c0_i32_0 : i32, i32
  }
  func.func @transform_2(%arg0: i32) -> (i32, i32) {
    %c0_i32 = arith.constant 0 : i32
    %c0_i32_0 = arith.constant 0 : i32
    %c0_i32_1 = arith.constant 0 : i32
    return %c0_i32, %c0_i32_0 : i32, i32
  }
  func.func @transform_3(%arg0: i32) -> (i32, i32, i32) {
    %c0_i32 = arith.constant 0 : i32
    %c0_i32_0 = arith.constant 0 : i32
    %c0_i32_1 = arith.constant 0 : i32
    return %arg0, %c0_i32, %c0_i32_0 : i32, i32, i32
  }
}

</mosaic_0001>

<llo_original>
// kernel: tpu_custom_call.1
$region0: #{tpu_custom_call.1}
  #allocation0 [shape = 'u32[]', space=smem, size = 0x4, offset = 0x4, fixed_abs, tag = 'smem constant byte address 0x4 - core index']
  #allocation1 [shape = 'u32[144,128]{1,0:T(1,128)}', space=vmem, size = 0x12000, scoped, tag = 'internal scratch']
  %s0 = inlined_call_operand.hbm [shape: f32[2,8,128], index: 0, kind: input, shape index: {}]
  %s1 = inlined_call_operand.hbm [shape: f32[128,384], index: 1, kind: input, shape index: {}]
  %s2 = inlined_call_operand.vmem [shape: f32[1,384], index: 2, kind: input, shape index: {}]
  %s3 = inlined_call_operand.hbm [shape: f32[2,8,128], index: 3, kind: output, shape index: {}]
  %s4 = sld [smem:[#allocation0]]
  $region53: #{tpu_custom_call.1} parent=0
    _
  %s6 = ssub.s32 1, %s4
  %s7 = scalar_select 0, %s6, %s4
  $region1: #{tpu_custom_call.1} parent=0
    #allocation2 [shape = 'u8[8192]{0}', space=vmem, size = 0x2000, scoped, tag = 'input window, operand 0']
    #allocation3 [shape = 's32[2]{0}', space=sflag, size = 0x8, scoped, tag = 'scoped memory for tpu_custom_call.1']
    #allocation4 [shape = 's32[2]{0}', space=sflag, size = 0x8, scoped, tag = 'scoped memory for tpu_custom_call.1']
    #allocation5 [shape = 'u8[196608]{0}', space=vmem, size = 0x30000, scoped, tag = 'input window, operand 1, single buffered']
    #allocation6 [shape = 's32[1]{0}', space=sflag, size = 0x4, scoped, tag = 'scoped memory for tpu_custom_call.1']
    #allocation7 [shape = 'u8[8192]{0}', space=vmem, size = 0x2000, scoped, tag = 'output window, operand 0']
    %8 = vsyncpa [#allocation3], 0
    %s9 = scalar_lea.sflag [#allocation3], 1
    %10 = vsyncpa %s9, 0
    %11 = vsyncpa [#allocation6], 0
    %12 = vsyncpa [#allocation4], 0
    %s13 = scalar_lea.sflag [#allocation4], 1
    %14 = vsyncpa %s13, 0
    loop: start=0, step=1, limit=4
    $region2: #{tpu_custom_call.1} parent=1 // loop_pre_header
      _
    $region3: #{tpu_custom_call.1} parent=1 // loop_header
      %s16 = sphi 0, %s20
      %p17 = scmp.ge.s32.totalorder %s16, 4
      %s26 = sphi 0, %s28
      %s29 = sphi 0, %s26
      %s30 = sphi 0, %s29
      %s46 = sphi 0, %s30
      %s50 = sphi 0, %s50
      %s52 = sphi 0, %s50
      %s53 = sphi 0, %s52
      %s67 = sphi 0, %s53
      %s71 = sphi 0, %s71
      %s73 = sphi 0, %s71
      %s74 = sphi 0, %s73
      %s88 = sphi 0, %s74
      %s94 = sphi 0, %s96
      %s97 = sphi 0, %s94
      %s98 = sphi 0, %s97
      %s114 = sphi 0, %s98
    $region4: #{tpu_custom_call.1} parent=1 // loop_header_branch
      %19 = sbr.rel (%p17) target = $region8
    $region5: #{tpu_custom_call.1} parent=1 // loop_body
      %s21 = ssub.s32 %s16, 1
      %s22 = ssub.s32 %s16, 2
      %s23 = sadd.s32 %s16, 1
      %s24 = ssub.s32 %s16, %s23
      %p25 = scmp.eq.s32.totalorder %s24, 0
      %s27 = sadd.s32 %s26, 1
      %s28 = scalar_select %p25, %s26, %s27
      %p31 = pneg %p25
      %p32 = scmp.eq.s32.totalorder %s16, 1
      %p33 = por %p31, %p32
      %p34 = scmp.ne.s32.totalorder %s26, %s29
      %p35 = scmp.eq.s32.totalorder %s16, 0
      %p36 = por %p34, %p35
      %p37 = scmp.ne.s32.totalorder %s26, %s29
      %p38 = scmp.eq.s32.totalorder %s21, 1
      %p39 = por %p37, %p38
      %p40 = scmp.ne.s32.totalorder %s29, %s30
      %p41 = scmp.eq.s32.totalorder %s21, 0
      %p42 = por %p40, %p41
      %p43 = scmp.ne.s32.totalorder %s29, %s30
      %p44 = scmp.eq.s32.totalorder %s22, 1
      %p45 = por %p43, %p44
      %p47 = scmp.ne.s32.totalorder %s30, %s46
      %p48 = scmp.eq.s32.totalorder %s22, 0
      %p49 = por %p47, %p48
      %s51 = sadd.s32 %s50, 1
      %p54 = scmp.eq.s32.totalorder %s16, 1
      %p55 = scmp.ne.s32.totalorder %s50, %s52
      %p56 = scmp.eq.s32.totalorder %s16, 0
      %p57 = por %p55, %p56
      %p58 = scmp.ne.s32.totalorder %s50, %s52
      %p59 = scmp.eq.s32.totalorder %s21, 1
      %p60 = por %p58, %p59
      %p61 = scmp.ne.s32.totalorder %s52, %s53
      %p62 = scmp.eq.s32.totalorder %s21, 0
      %p63 = por %p61, %p62
      %p64 = scmp.ne.s32.totalorder %s52, %s53
      %p65 = scmp.eq.s32.totalorder %s22, 1
      %p66 = por %p64, %p65
      %p68 = scmp.ne.s32.totalorder %s53, %s67
      %p69 = scmp.eq.s32.totalorder %s22, 0
      %p70 = por %p68, %p69
      %s72 = sadd.s32 %s71, 1
      %p75 = scmp.eq.s32.totalorder %s16, 1
      %p76 = scmp.ne.s32.totalorder %s71, %s73
      %p77 = scmp.eq.s32.totalorder %s16, 0
      %p78 = por %p76, %p77
      %p79 = scmp.ne.s32.totalorder %s71, %s73
      %p80 = scmp.eq.s32.totalorder %s21, 1
      %p81 = por %p79, %p80
      %p82 = scmp.ne.s32.totalorder %s73, %s74
      %p83 = scmp.eq.s32.totalorder %s21, 0
      %p84 = por %p82, %p83
      %p85 = scmp.ne.s32.totalorder %s73, %s74
      %p86 = scmp.eq.s32.totalorder %s22, 1
      %p87 = por %p85, %p86
      %p89 = scmp.ne.s32.totalorder %s74, %s88
      %p90 = scmp.eq.s32.totalorder %s22, 0
      %p91 = por %p89, %p90
      %s92 = ssub.s32 %s16, %s23
      %p93 = scmp.eq.s32.totalorder %s92, 0
      %s95 = sadd.s32 %s94, 1
      %s96 = scalar_select %p93, %s94, %s95
      %p99 = pneg %p93
      %p100 = scmp.eq.s32.totalorder %s16, 1
      %p101 = por %p99, %p100
      %p102 = scmp.ne.s32.totalorder %s94, %s97
      %p103 = scmp.eq.s32.totalorder %s16, 0
      %p104 = por %p102, %p103
      %p105 = scmp.ne.s32.totalorder %s94, %s97
      %p106 = scmp.eq.s32.totalorder %s21, 1
      %p107 = por %p105, %p106
      %p108 = scmp.ne.s32.totalorder %s97, %s98
      %p109 = scmp.eq.s32.totalorder %s21, 0
      %p110 = por %p108, %p109
      %p111 = scmp.ne.s32.totalorder %s97, %s98
      %p112 = scmp.eq.s32.totalorder %s22, 1
      %p113 = por %p111, %p112
      %p115 = scmp.ne.s32.totalorder %s98, %s114
      %p116 = scmp.eq.s32.totalorder %s22, 0
      %p117 = por %p115, %p116
      %p118 = scmp.le.s32.totalorder 1, %s16
      %p119 = scmp.lt.s32.totalorder %s16, 3
      %p120 = pnand %p118, %p119
      %p121 = pneg %p120
      // Predicated region
      $region9: #{tpu_custom_call.1} parent=5 // pred_check
        _
      $region10: #{tpu_custom_call.1} parent=5 // pred_check_branch
        %123 = sbr.rel (%p120) target = $region12
      $region11: #{tpu_custom_call.1} parent=5 // pred_region
        %s124 = ssub.s32 %s16, 1
        // Predicated region
        $region13: #{tpu_custom_call.1} parent=11 // pred_check
          %p125 = pneg %p63
        $region14: #{tpu_custom_call.1} parent=11 // pred_check_branch
          %127 = sbr.rel (%p125) target = $region16
        $region15: #{tpu_custom_call.1} parent=11 // pred_region
          %s129 = ssub.s32 6144, 6144
          %130 = vsyncadd [#allocation6], %s129
          %s131 = sshll.u32 [#allocation5], 4
          %s132 = int_to_ptr.vmem [resolvable:$true] %s131
          %137 = dma.hbm_to_vmem [thread:$0]  %s1, 6144, %s132, [#allocation6], 384, 384, 24
        $region16: #{tpu_custom_call.1} parent=11 // pred_fallthru
          _
        // Predicated region
        $region17: #{tpu_custom_call.1} parent=11 // pred_check
          %p138 = pneg %p84
        $region18: #{tpu_custom_call.1} parent=11 // pred_check_branch
          %140 = sbr.rel (%p138) target = $region20
        $region19: #{tpu_custom_call.1} parent=11 // pred_region
          _
        $region20: #{tpu_custom_call.1} parent=11 // pred_fallthru
          _
      $region12: #{tpu_custom_call.1} parent=5 // pred_fallthru
        _
      %p141 = scmp.lt.s32.totalorder %s16, 2
      // Predicated region
      $region21: #{tpu_custom_call.1} parent=5 // pred_check
        %p142 = pneg %p141
      $region22: #{tpu_custom_call.1} parent=5 // pred_check_branch
        %144 = sbr.rel (%p142) target = $region24
      $region23: #{tpu_custom_call.1} parent=5 // pred_region
        // Predicated region
        $region25: #{tpu_custom_call.1} parent=23 // pred_check
          %p145 = pneg %p36
        $region26: #{tpu_custom_call.1} parent=23 // pred_check_branch
          %147 = sbr.rel (%p145) target = $region28
        $region27: #{tpu_custom_call.1} parent=23 // pred_region
          %s148 = sand.u32 %s26, 1
          %s149 = scalar_lea.sflag [#allocation3], %s148
          %s150 = sand.u32 %s26, 1
          %s151 = smul.addr %s150, 8
          %s152 = scalar_lea.vmem [#allocation2], %s151
          %s154 = ssub.s32 128, 128
          %155 = vsyncadd %s149, %s154
          %s156 = smul.addr %s16, 128
          %s157 = scalar_lea.hbm %s0, %s156
          %s159 = sshll.u32 %s152, 4
          %s160 = int_to_ptr.vmem [resolvable:$true] %s159
          %162 = dma.hbm_to_vmem [thread:$0]  %s157, 128, %s160, %s149
        $region28: #{tpu_custom_call.1} parent=23 // pred_fallthru
          _
      $region24: #{tpu_custom_call.1} parent=5 // pred_fallthru
        _
      %p163 = scmp.le.s32.totalorder 1, %s16
      %p164 = scmp.lt.s32.totalorder %s16, 3
      %p165 = pnand %p163, %p164
      %p166 = pneg %p165
      // Predicated region
      $region29: #{tpu_custom_call.1} parent=5 // pred_check
        _
      $region30: #{tpu_custom_call.1} parent=5 // pred_check_branch
        %168 = sbr.rel (%p165) target = $region32
      $region31: #{tpu_custom_call.1} parent=5 // pred_region
        %s169 = ssub.s32 %s16, 1
        %s170 = sand.u32 %s29, 1
        %s171 = scalar_lea.sflag [#allocation3], %s170
        %s172 = sand.u32 %s29, 1
        %s173 = smul.addr %s172, 8
        %s174 = scalar_lea.vmem [#allocation2], %s173
        // Predicated region
        $region33: #{tpu_custom_call.1} parent=31 // pred_check
          %p175 = pneg %p42
        $region34: #{tpu_custom_call.1} parent=31 // pred_check_branch
          %177 = sbr.rel (%p175) target = $region36
        $region35: #{tpu_custom_call.1} parent=31 // pred_region
          %178 = dma.done %s171, 128
        $region36: #{tpu_custom_call.1} parent=31 // pred_fallthru
          _
        // Predicated region
        $region37: #{tpu_custom_call.1} parent=31 // pred_check
          %p179 = pneg %p63
        $region38: #{tpu_custom_call.1} parent=31 // pred_check_branch
          %181 = sbr.rel (%p179) target = $region40
        $region39: #{tpu_custom_call.1} parent=31 // pred_region
          %182 = dma.done [#allocation6], 6144
        $region40: #{tpu_custom_call.1} parent=31 // pred_fallthru
          _
        %s183 = sand.u32 %s29, 1
        %s184 = scalar_lea.sflag [#allocation3], %s183
        %s185 = sand.u32 %s29, 1
        %s186 = smul.addr %s185, 8
        %s187 = scalar_lea.vmem [#allocation2], %s186
        %p188 = pneg %p42
        %p189 = pneg %p39
        %p190 = pneg %p63
        %p191 = pneg %p60
        %p192 = pneg %p84
        %p193 = pneg %p81
        %p194 = pneg %p110
        %p195 = pneg %p107
        %s196 = sand.u32 %s97, 1
        %s197 = scalar_lea.sflag [#allocation4], %s196
        %s198 = sand.u32 %s97, 1
        %s199 = smul.addr %s198, 8
        %s200 = scalar_lea.vmem [#allocation7], %s199
        %v201 = vld [vmem:[%s174] sm:$0xff]
        %v202 = vld [vmem:[#allocation5] sm:$0xff]
        %v203 = vld [vmem:[#allocation5 + $0x8] sm:$0xff]
        %v204 = vld [vmem:[#allocation5 + $0x10] sm:$0xff]
        %v205 = vld [vmem:[#allocation5 + $0x18] sm:$0xff]
        %v206 = vld [vmem:[#allocation5 + $0x20] sm:$0xff]
        %v207 = vld [vmem:[#allocation5 + $0x28] sm:$0xff]
        %v208 = vld [vmem:[#allocation5 + $0x30] sm:$0xff]
        %v209 = vld [vmem:[#allocation5 + $0x38] sm:$0xff]
        %v210 = vld [vmem:[#allocation5 + $0x40] sm:$0xff]
        %v211 = vld [vmem:[#allocation5 + $0x48] sm:$0xff]
        %v212 = vld [vmem:[#allocation5 + $0x50] sm:$0xff]
        %v213 = vld [vmem:[#allocation5 + $0x58] sm:$0xff]
        %v214 = vld [vmem:[#allocation5 + $0x60] sm:$0xff]
        %v215 = vld [vmem:[#allocation5 + $0x68] sm:$0xff]
        %v216 = vld [vmem:[#allocation5 + $0x70] sm:$0xff]
        %v217 = vld [vmem:[#allocation5 + $0x78] sm:$0xff]
        %v218 = vld [vmem:[#allocation5 + $0x80] sm:$0xff]
        %v219 = vld [vmem:[#allocation5 + $0x88] sm:$0xff]
        %v220 = vld [vmem:[#allocation5 + $0x90] sm:$0xff]
        %v221 = vld [vmem:[#allocation5 + $0x98] sm:$0xff]
        %v222 = vld [vmem:[#allocation5 + $0xa0] sm:$0xff]
        %v223 = vld [vmem:[#allocation5 + $0xa8] sm:$0xff]
        %v224 = vld [vmem:[#allocation5 + $0xb0] sm:$0xff]
        %v225 = vld [vmem:[#allocation5 + $0xb8] sm:$0xff]
        %v226 = vld [vmem:[#allocation5 + $0xc0] sm:$0xff]
        %v227 = vld [vmem:[#allocation5 + $0xc8] sm:$0xff]
        %v228 = vld [vmem:[#allocation5 + $0xd0] sm:$0xff]
        %v229 = vld [vmem:[#allocation5 + $0xd8] sm:$0xff]
        %v230 = vld [vmem:[#allocation5 + $0xe0] sm:$0xff]
        %v231 = vld [vmem:[#allocation5 + $0xe8] sm:$0xff]
        %v232 = vld [vmem:[#allocation5 + $0xf0] sm:$0xff]
        %v233 = vld [vmem:[#allocation5 + $0xf8] sm:$0xff]
        %v234 = vld [vmem:[#allocation5 + $0x100] sm:$0xff]
        %v235 = vld [vmem:[#allocation5 + $0x108] sm:$0xff]
        %v236 = vld [vmem:[#allocation5 + $0x110] sm:$0xff]
        %v237 = vld [vmem:[#allocation5 + $0x118] sm:$0xff]
        %v238 = vld [vmem:[#allocation5 + $0x120] sm:$0xff]
        %v239 = vld [vmem:[#allocation5 + $0x128] sm:$0xff]
        %v240 = vld [vmem:[#allocation5 + $0x130] sm:$0xff]
        %v241 = vld [vmem:[#allocation5 + $0x138] sm:$0xff]
        %v242 = vld [vmem:[#allocation5 + $0x140] sm:$0xff]
        %v243 = vld [vmem:[#allocation5 + $0x148] sm:$0xff]
        %v244 = vld [vmem:[#allocation5 + $0x150] sm:$0xff]
        %v245 = vld [vmem:[#allocation5 + $0x158] sm:$0xff]
        %v246 = vld [vmem:[#allocation5 + $0x160] sm:$0xff]
        %v247 = vld [vmem:[#allocation5 + $0x168] sm:$0xff]
        %v248 = vld [vmem:[#allocation5 + $0x170] sm:$0xff]
        %v249 = vld [vmem:[#allocation5 + $0x178] sm:$0xff]
        %v250 = vld [vmem:[%s2] sm:$0x7]
        %v252 = vlaneseq
        %v253 = vshrl.u32 %v252, 7
        %v254 = vsub.s32 0, %v253
        %v255 = vrot.slane %v250, %v254
        %v256 = vlaneseq
        %v257 = vshrl.u32 %v256, 7
        %v258 = vsub.s32 1, %v257
        %v259 = vrot.slane %v250, %v258
        %v260 = vlaneseq
        %v261 = vshrl.u32 %v260, 7
        %v262 = vsub.s32 2, %v261
        %v263 = vrot.slane %v250, %v262
        %267 = vmatprep.subr.mxu0 %v203
        %268 = vmatpush1.msra.mxu0 %v202
        %269 = vmatprep.subr.mxu0 %v206
        %270 = vmatpush1.msra.mxu0 %v205
        %271 = vmatprep.subr.mxu0 %v209
        %272 = vmatpush1.msra.mxu0 %v208
        %273 = vmatprep.subr.mxu0 %v212
        %274 = vmatpush1.msra.mxu0 %v211
        %275 = vmatprep.subr.mxu0 %v215
        %276 = vmatpush1.msra.mxu0 %v214
        %277 = vmatprep.subr.mxu0 %v218
        %278 = vmatpush1.msra.mxu0 %v217
        %279 = vmatprep.subr.mxu0 %v221
        %280 = vmatpush1.msra.mxu0 %v220
        %281 = vmatprep.subr.mxu0 %v224
        %282 = vmatpush1.msra.mxu0 %v223
        %283 = vmatprep.subr.mxu0 %v227
        %284 = vmatpush1.msra.mxu0 %v226
        %285 = vmatprep.subr.mxu0 %v230
        %286 = vmatpush1.msra.mxu0 %v229
        %287 = vmatprep.subr.mxu0 %v233
        %288 = vmatpush1.msra.mxu0 %v232
        %289 = vmatprep.subr.mxu0 %v236
        %290 = vmatpush1.msra.mxu0 %v235
        %291 = vmatprep.subr.mxu0 %v239
        %292 = vmatpush1.msra.mxu0 %v238
        %293 = vmatprep.subr.mxu0 %v242
        %294 = vmatpush1.msra.mxu0 %v241
        %295 = vmatprep.subr.mxu0 %v245
        %296 = vmatpush1.msra.mxu0 %v244
        %297 = vmatprep.subr.mxu0 %v248
        %298 = vmatpush1.msra.mxu0 %v247
        %299 = vmatprep.subr.mxu0 0.0
        %300 = vmatpush1.msra.mxu0 0.0
        %301 = vmatprep.subr.mxu0 0.0
        %302 = vmatpush1.msra.mxu0 0.0
        %303 = vmatprep.subr.mxu0 0.0
        %304 = vmatpush1.msra.mxu0 0.0
        %305 = vmatprep.subr.mxu0 0.0
        %306 = vmatpush1.msra.mxu0 0.0
        %307 = vmatprep.subr.mxu0 0.0
        %308 = vmatpush1.msra.mxu0 0.0
        %309 = vmatprep.subr.mxu0 0.0
        %310 = vmatpush1.msra.mxu0 0.0
        %311 = vmatprep.subr.mxu0 0.0
        %312 = vmatpush1.msra.mxu0 0.0
        %313 = vmatprep.subr.mxu0 0.0
        %314 = vmatpush1.msra.mxu0 0.0
        %315 = vmatprep.subr.mxu0 0.0
        %316 = vmatpush1.msra.mxu0 0.0
        %317 = vmatprep.subr.mxu0 0.0
        %318 = vmatpush1.msra.mxu0 0.0
        %319 = vmatprep.subr.mxu0 0.0
        %320 = vmatpush1.msra.mxu0 0.0
        %321 = vmatprep.subr.mxu0 0.0
        %322 = vmatpush1.msra.mxu0 0.0
        %323 = vmatprep.subr.mxu0 0.0
        %324 = vmatpush1.msra.mxu0 0.0
        %325 = vmatprep.subr.mxu0 0.0
        %326 = vmatpush1.msra.mxu0 0.0
        %327 = vmatprep.subr.mxu0 0.0
        %328 = vmatpush1.msra.mxu0 0.0
        %329 = vmatprep.subr.mxu0 0.0
        %330 = vmatpush1.msra.mxu0 0.0
        %331 = vmatprep.mubr.f32.mxu0 0.0
        %332 = vmatmul.mubr.f32.gmra.mrb[0].mxu0 %v201
        %v333 = vpop.f32.mrb[0].mxu0
        %v334 = vadd.f32 %v255, %v333
        %v335 = vpop.f32.mrb[0].mxu0
        %v336 = vadd.f32 %v259, %v335
        %337 = vdwg.mxu0
        %338 = vmatprep.subr.mxu0 0.0
        %339 = vmatpush1.msra.mxu0 %v204
        %340 = vmatprep.subr.mxu0 0.0
        %341 = vmatpush1.msra.mxu0 %v207
        %342 = vmatprep.subr.mxu0 0.0
        %343 = vmatpush1.msra.mxu0 %v210
        %344 = vmatprep.subr.mxu0 0.0
        %345 = vmatpush1.msra.mxu0 %v213
        %346 = vmatprep.subr.mxu0 0.0
        %347 = vmatpush1.msra.mxu0 %v216
        %348 = vmatprep.subr.mxu0 0.0
        %349 = vmatpush1.msra.mxu0 %v219
        %350 = vmatprep.subr.mxu0 0.0
        %351 = vmatpush1.msra.mxu0 %v222
        %352 = vmatprep.subr.mxu0 0.0
        %353 = vmatpush1.msra.mxu0 %v225
        %354 = vmatprep.subr.mxu0 0.0
        %355 = vmatpush1.msra.mxu0 %v228
        %356 = vmatprep.subr.mxu0 0.0
        %357 = vmatpush1.msra.mxu0 %v231
        %358 = vmatprep.subr.mxu0 0.0
        %359 = vmatpush1.msra.mxu0 %v234
        %360 = vmatprep.subr.mxu0 0.0
        %361 = vmatpush1.msra.mxu0 %v237
        %362 = vmatprep.subr.mxu0 0.0
        %363 = vmatpush1.msra.mxu0 %v240
        %364 = vmatprep.subr.mxu0 0.0
        %365 = vmatpush1.msra.mxu0 %v243
        %366 = vmatprep.subr.mxu0 0.0
        %367 = vmatpush1.msra.mxu0 %v246
        %368 = vmatprep.subr.mxu0 0.0
        %369 = vmatpush1.msra.mxu0 %v249
        %370 = vmatprep.subr.mxu0 0.0
        %371 = vmatpush1.msra.mxu0 0.0
        %372 = vmatprep.subr.mxu0 0.0
        %373 = vmatpush1.msra.mxu0 0.0
        %374 = vmatprep.subr.mxu0 0.0
        %375 = vmatpush1.msra.mxu0 0.0
        %376 = vmatprep.subr.mxu0 0.0
        %377 = vmatpush1.msra.mxu0 0.0
        %378 = vmatprep.subr.mxu0 0.0
        %379 = vmatpush1.msra.mxu0 0.0
        %380 = vmatprep.subr.mxu0 0.0
        %381 = vmatpush1.msra.mxu0 0.0
        %382 = vmatprep.subr.mxu0 0.0
        %383 = vmatpush1.msra.mxu0 0.0
        %384 = vmatprep.subr.mxu0 0.0
        %385 = vmatpush1.msra.mxu0 0.0
        %386 = vmatprep.subr.mxu0 0.0
        %387 = vmatpush1.msra.mxu0 0.0
        %388 = vmatprep.subr.mxu0 0.0
        %389 = vmatpush1.msra.mxu0 0.0
        %390 = vmatprep.subr.mxu0 0.0
        %391 = vmatpush1.msra.mxu0 0.0
        %392 = vmatprep.subr.mxu0 0.0
        %393 = vmatpush1.msra.mxu0 0.0
        %394 = vmatprep.subr.mxu0 0.0
        %395 = vmatpush1.msra.mxu0 0.0
        %396 = vmatprep.subr.mxu0 0.0
        %397 = vmatpush1.msra.mxu0 0.0
        %398 = vmatprep.subr.mxu0 0.0
        %399 = vmatpush1.msra.mxu0 0.0
        %400 = vmatprep.subr.mxu0 0.0
        %401 = vmatpush1.msra.mxu0 0.0
        %402 = vmatprep.mubr.f32.mxu0 0.0
        %403 = vmatmul.mubr.f32.gmra.mrb[0].mxu0 %v201
        %v404 = vpop.f32.mrb[0].mxu0
        %v405 = vadd.f32 %v263, %v404
        %v406 = vpop.f32.mrb[0].mxu0
        %407 = vdwg.mxu0
        %408 = vmatprep.subr.mxu0 0.0
        %409 = vmatpush1.xpose.msra.mxu0 %v336
        %410 = vmatprep.subr.mxu0 0.0
        %411 = vmatpush1.xpose.msra.mxu0 0.0
        %412 = vmatprep.subr.mxu0 0.0
        %413 = vmatpush1.xpose.msra.mxu0 0.0
        %414 = vmatprep.subr.mxu0 0.0
        %415 = vmatpush1.xpose.msra.mxu0 0.0
        %416 = vmatprep.subr.mxu0 0.0
        %417 = vmatpush1.xpose.msra.mxu0 0.0
        %418 = vmatprep.subr.mxu0 0.0
        %419 = vmatpush1.xpose.msra.mxu0 0.0
        %420 = vmatprep.subr.mxu0 0.0
        %421 = vmatpush1.xpose.msra.mxu0 0.0
        %422 = vmatprep.subr.mxu0 0.0
        %423 = vmatpush1.xpose.msra.mxu0 0.0
        %424 = vmatprep.subr.mxu0 0.0
        %425 = vmatpush1.xpose.msra.mxu0 0.0
        %426 = vmatprep.subr.mxu0 0.0
        %427 = vmatpush1.xpose.msra.mxu0 0.0
        %428 = vmatprep.subr.mxu0 0.0
        %429 = vmatpush1.xpose.msra.mxu0 0.0
        %430 = vmatprep.subr.mxu0 0.0
        %431 = vmatpush1.xpose.msra.mxu0 0.0
        %432 = vmatprep.subr.mxu0 0.0
        %433 = vmatpush1.xpose.msra.mxu0 0.0
        %434 = vmatprep.subr.mxu0 0.0
        %435 = vmatpush1.xpose.msra.mxu0 0.0
        %436 = vmatprep.subr.mxu0 0.0
        %437 = vmatpush1.xpose.msra.mxu0 0.0
        %438 = vmatprep.subr.mxu0 0.0
        %439 = vmatpush1.xpose.msra.mxu0 0.0
        %440 = vmatprep.subr.mxu0 0.0
        %441 = vmatpush1.xpose.msra.mxu0 0.0
        %442 = vmatprep.subr.mxu0 0.0
        %443 = vmatpush1.xpose.msra.mxu0 0.0
        %444 = vmatprep.subr.mxu0 0.0
        %445 = vmatpush1.xpose.msra.mxu0 0.0
        %446 = vmatprep.subr.mxu0 0.0
        %447 = vmatpush1.xpose.msra.mxu0 0.0
        %448 = vmatprep.subr.mxu0 0.0
        %449 = vmatpush1.xpose.msra.mxu0 0.0
        %450 = vmatprep.subr.mxu0 0.0
        %451 = vmatpush1.xpose.msra.mxu0 0.0
        %452 = vmatprep.subr.mxu0 0.0
        %453 = vmatpush1.xpose.msra.mxu0 0.0
        %454 = vmatprep.subr.mxu0 0.0
        %455 = vmatpush1.xpose.msra.mxu0 0.0
        %456 = vmatprep.subr.mxu0 0.0
        %457 = vmatpush1.xpose.msra.mxu0 0.0
        %458 = vmatprep.subr.mxu0 0.0
        %459 = vmatpush1.xpose.msra.mxu0 0.0
        %460 = vmatprep.subr.mxu0 0.0
        %461 = vmatpush1.xpose.msra.mxu0 0.0
        %462 = vmatprep.subr.mxu0 0.0
        %463 = vmatpush1.xpose.msra.mxu0 0.0
        %464 = vmatprep.subr.mxu0 0.0
        %465 = vmatpush1.xpose.msra.mxu0 0.0
        %466 = vmatprep.subr.mxu0 0.0
        %467 = vmatpush1.xpose.msra.mxu0 0.0
        %468 = vmatprep.subr.mxu0 0.0
        %469 = vmatpush1.xpose.msra.mxu0 0.0
        %470 = vmatprep.subr.mxu0 0.0
        %471 = vmatpush1.xpose.msra.mxu0 0.0
        %472 = vmatprep.mubr.f32.mxu0 0.0
        %473 = vmatmul.mubr.f32.gmra.mrb[0].mxu0 %v334
        %v474 = vpop.f32.mrb[0].mxu0
        %v475 = vadd.f32 0.0, %v474
        %v476 = vpop.f32.mrb[0].mxu0
        %477 = vdwg.mxu0
        %vm478 = vcmask 64512
        %v479 = vsel %vm478, %v475, -inf
        %480 = vmax.xlane.f32.xlu0 %v479
        %v481 = vpop.xlane.xlu0 %480
        %v482 = vsub.f32 %v475, %v481
        %v483 = vmul.f32 %v482, 1.442695
        %v484 = vpow.pop %v483
        %v485 = vsel %vm478, %v484, 0.0
        %486 = vadd.xlane.f32.xlu0 %v485
        %v487 = vpop.xlane.xlu0 %486
        %v488 = vrcp.pop %v487
        %v489 = vmul.f32 %v484, %v488
        %v491 = vsel %vm478, %v489, 0
        %493 = vmatprep.subr.mxu0 0.0
        %494 = vmatpush1.msra.mxu0 %v405
        %495 = vmatprep.subr.mxu0 0.0
        %496 = vmatpush1.msra.mxu0 0.0
        %497 = vmatprep.subr.mxu0 0.0
        %498 = vmatpush1.msra.mxu0 0.0
        %499 = vmatprep.subr.mxu0 0.0
        %500 = vmatpush1.msra.mxu0 0.0
        %501 = vmatprep.subr.mxu0 0.0
        %502 = vmatpush1.msra.mxu0 0.0
        %503 = vmatprep.subr.mxu0 0.0
        %504 = vmatpush1.msra.mxu0 0.0
        %505 = vmatprep.subr.mxu0 0.0
        %506 = vmatpush1.msra.mxu0 0.0
        %507 = vmatprep.subr.mxu0 0.0
        %508 = vmatpush1.msra.mxu0 0.0
        %509 = vmatprep.subr.mxu0 0.0
        %510 = vmatpush1.msra.mxu0 0.0
        %511 = vmatprep.subr.mxu0 0.0
        %512 = vmatpush1.msra.mxu0 0.0
        %513 = vmatprep.subr.mxu0 0.0
        %514 = vmatpush1.msra.mxu0 0.0
        %515 = vmatprep.subr.mxu0 0.0
        %516 = vmatpush1.msra.mxu0 0.0
        %517 = vmatprep.subr.mxu0 0.0
        %518 = vmatpush1.msra.mxu0 0.0
        %519 = vmatprep.subr.mxu0 0.0
        %520 = vmatpush1.msra.mxu0 0.0
        %521 = vmatprep.subr.mxu0 0.0
        %522 = vmatpush1.msra.mxu0 0.0
        %523 = vmatprep.subr.mxu0 0.0
        %524 = vmatpush1.msra.mxu0 0.0
        %525 = vmatprep.subr.mxu0 0.0
        %526 = vmatpush1.msra.mxu0 0.0
        %527 = vmatprep.subr.mxu0 0.0
        %528 = vmatpush1.msra.mxu0 0.0
        %529 = vmatprep.subr.mxu0 0.0
        %530 = vmatpush1.msra.mxu0 0.0
        %531 = vmatprep.subr.mxu0 0.0
        %532 = vmatpush1.msra.mxu0 0.0
        %533 = vmatprep.subr.mxu0 0.0
        %534 = vmatpush1.msra.mxu0 0.0
        %535 = vmatprep.subr.mxu0 0.0
        %536 = vmatpush1.msra.mxu0 0.0
        %537 = vmatprep.subr.mxu0 0.0
        %538 = vmatpush1.msra.mxu0 0.0
        %539 = vmatprep.subr.mxu0 0.0
        %540 = vmatpush1.msra.mxu0 0.0
        %541 = vmatprep.subr.mxu0 0.0
        %542 = vmatpush1.msra.mxu0 0.0
        %543 = vmatprep.subr.mxu0 0.0
        %544 = vmatpush1.msra.mxu0 0.0
        %545 = vmatprep.subr.mxu0 0.0
        %546 = vmatpush1.msra.mxu0 0.0
        %547 = vmatprep.subr.mxu0 0.0
        %548 = vmatpush1.msra.mxu0 0.0
        %549 = vmatprep.subr.mxu0 0.0
        %550 = vmatpush1.msra.mxu0 0.0
        %551 = vmatprep.subr.mxu0 0.0
        %552 = vmatpush1.msra.mxu0 0.0
        %553 = vmatprep.subr.mxu0 0.0
        %554 = vmatpush1.msra.mxu0 0.0
        %555 = vmatprep.subr.mxu0 0.0
        %556 = vmatpush1.msra.mxu0 0.0
        %557 = vmatprep.mubr.f32.mxu0 0.0
        %558 = vmatmul.mubr.f32.gmra.mrb[0].mxu0 %v491
        %v559 = vpop.f32.mrb[0].mxu0
        %v560 = vadd.f32 0.0, %v559
        %v561 = vpop.f32.mrb[0].mxu0
        %562 = vdwg.mxu0
        %563 = vst [vmem:[%s200] sm:$0xff] %v560
        %s564 = sand.u32 %s97, 1
        %s565 = scalar_lea.sflag [#allocation4], %s564
        %s566 = sand.u32 %s97, 1
        %s567 = smul.addr %s566, 8
        %s568 = scalar_lea.vmem [#allocation7], %s567
        // Predicated region
        $region41: #{tpu_custom_call.1} parent=31 // pred_check
          %p569 = pneg %p107
        $region42: #{tpu_custom_call.1} parent=31 // pred_check_branch
          %571 = sbr.rel (%p569) target = $region44
        $region43: #{tpu_custom_call.1} parent=31 // pred_region
          %s573 = ssub.s32 128, 128
          %574 = vsyncadd %s565, %s573
          %s575 = smul.addr %s21, 128
          %s576 = scalar_lea.hbm %s3, %s575
          %s578 = sshll.u32 %s568, 4
          %s579 = int_to_ptr.vmem [resolvable:$true] %s578
          %581 = dma.vmem_to_hbm [thread:$0]  %s579, 128, %s576, %s565
        $region44: #{tpu_custom_call.1} parent=31 // pred_fallthru
          _
      $region32: #{tpu_custom_call.1} parent=5 // pred_fallthru
        _
      %p582 = scmp.le.s32.totalorder 2, %s16
      // Predicated region
      $region45: #{tpu_custom_call.1} parent=5 // pred_check
        %p583 = pneg %p582
      $region46: #{tpu_custom_call.1} parent=5 // pred_check_branch
        %585 = sbr.rel (%p583) target = $region48
      $region47: #{tpu_custom_call.1} parent=5 // pred_region
        %s586 = ssub.s32 %s16, 2
        // Predicated region
        $region49: #{tpu_custom_call.1} parent=47 // pred_check
          %p587 = pneg %p113
        $region50: #{tpu_custom_call.1} parent=47 // pred_check_branch
          %589 = sbr.rel (%p587) target = $region52
        $region51: #{tpu_custom_call.1} parent=47 // pred_region
          %s590 = sand.u32 %s98, 1
          %s591 = scalar_lea.sflag [#allocation4], %s590
          %s592 = sand.u32 %s98, 1
          %s593 = smul.addr %s592, 8
          %s594 = scalar_lea.vmem [#allocation7], %s593
          %595 = dma.done %s591, 128
        $region52: #{tpu_custom_call.1} parent=47 // pred_fallthru
          _
      $region48: #{tpu_custom_call.1} parent=5 // pred_fallthru
        _
    $region6: #{tpu_custom_call.1} parent=1 // loop_footer
      %s20 = sadd.s32 1, %s16
    $region7: #{tpu_custom_call.1} parent=1 // loop_footer_branch
      %15 = sbr.rel target = $region3
    $region8: #{tpu_custom_call.1} parent=1 // loop_exit
      _
    %596 = vsyncpa [#allocation3], 1
    %s597 = scalar_lea.sflag [#allocation3], 1
    %598 = vsyncpa %s597, 1
    %599 = vsyncpa [#allocation6], 1
    %600 = vsyncpa [#allocation4], 1
    %s601 = scalar_lea.sflag [#allocation4], 1
    %602 = vsyncpa %s601, 1

</llo_original>
